<compile_context>
chip_gen: v5e
topology: v5e:2x2
jax: 0.10.0
libtpu: 0.0.40
codegen_flags: <defaults>
</compile_context>

<pallas_src>
import functools

import jax
import jax.numpy as jnp
from jax.experimental import pallas as pl
from jax.experimental.pallas import tpu as pltpu


def _lstm_chunk_kernel(xw_ref, whh_t_ref, hn_ref, cn_ref, *,
                       hidden_size, seq_len, chunk):
    """Processes one time-chunk of the serial LSTM recurrence.

    xw_ref[tt] already holds x_t @ W_ih^T + (b_ih + b_hh) (bf16).
    PyTorch gate order (i, f, g, o); zero initial state (nn.LSTM default when
    no hidden is passed, as in EncoderRNN.forward).  h/c live in the
    constant-index output blocks hn_ref / cn_ref across grid iterations.
    """
    H = hidden_size
    t_blk = pl.program_id(0)

    # Zero the carried state on the first time-chunk.
    @pl.when(t_blk == 0)
    def _init():
        hn_ref[...] = jnp.zeros_like(hn_ref)
        cn_ref[...] = jnp.zeros_like(cn_ref)

    # Hoist the recurrent weight load out of the time loop (VMEM-resident;
    # its block index is constant so Pallas never re-DMAs it).
    whh_t = whh_t_ref[...]                                   # (H, 4H) bf16

    base = t_blk * chunk                                     # first global step
    ragged = (seq_len % chunk) != 0                          # static Python bool

    def step(tt, carry):
        h, c = carry                                         # f32 (B, H) state
        # gates_t = (x_t @ W_ih^T + b) + h_{t-1} @ W_hh^T    -> (B, 4H) f32
        gates = xw_ref[tt].astype(jnp.float32) + jnp.dot(
            h.astype(whh_t.dtype), whh_t, preferred_element_type=jnp.float32)

        # Two full-tile EUP passes instead of four narrow per-gate ones.
        sig = jax.nn.sigmoid(gates)                          # i, f, o
        tnh = jnp.tanh(gates)                                # g
        i_g = sig[:, 0 * H:1 * H]
        f_g = sig[:, 1 * H:2 * H]
        g_g = tnh[:, 2 * H:3 * H]
        o_g = sig[:, 3 * H:4 * H]

        c_new = f_g * c + i_g * g_g
        h_new = o_g * jnp.tanh(c_new)

        if ragged:
            # Mask out zero-padded tail steps (only traced for ragged T/chunk).
            t_glob = jnp.full(h_new.shape, base + tt, jnp.int32)
            valid = t_glob < seq_len
            h_new = jnp.where(valid, h_new, h)
            c_new = jnp.where(valid, c_new, c)
        return h_new, c_new

    h_f, c_f = jax.lax.fori_loop(
        0, chunk, step, (hn_ref[...], cn_ref[...]),
        unroll=min(chunk, 8))                                # bounded unroll

    hn_ref[...] = h_f
    cn_ref[...] = c_f


def _auto_time_chunk(T, B, H, target_bytes=2 * 1024 * 1024):
    """Pick a time-chunk so each pipelined bf16 xw buffer is ~target_bytes."""
    per_step = B * 4 * H * 2                                 # bf16 bytes / step
    return max(1, min(T, target_bytes // per_step))


def encoder_rnn_forward(x, params, *, time_chunk=None,
                        compute_dtype=jnp.bfloat16):
    """Pallas equivalent of EncoderRNN.forward for num_layers=1.

    x: (B, T, input_size) float32, batch_first like the PyTorch module.
    Returns (h_n, c_n), each (1, B, hidden_size) float32.
    """
    B, T, I = x.shape
    H = params["w_hh"].shape[1]
    G4 = 4 * H

    # --- pre-pass (plain XLA): hoisted, time-independent input projection.
    # One (T*B, I) x (I, 4H) matmul with the fused bias folded in; only the
    # h @ W_hh^T matmul stays on the serial critical path inside the kernel.
    wih_t = jnp.transpose(params["w_ih"]).astype(compute_dtype)      # (I, 4H)
    whh_t = jnp.transpose(params["w_hh"]).astype(compute_dtype)      # (H, 4H)
    bias = (params["b_ih"] + params["b_hh"]).astype(jnp.float32)     # (4H,)

    x_tbi = jnp.transpose(x, (1, 0, 2)).astype(compute_dtype)        # (T, B, I)
    xw = jnp.dot(x_tbi.reshape(T * B, I), wih_t,
                 preferred_element_type=jnp.float32) + bias[None, :]
    # bf16 streaming storage: halves the dominant HBM->VMEM traffic.
    xw = xw.astype(compute_dtype).reshape(T, B, G4)                  # (T,B,4H)

    if time_chunk is None:
        time_chunk = _auto_time_chunk(T, B, H)
    chunk = max(1, min(int(time_chunk), T))
    n_blk = (T + chunk - 1) // chunk
    T_pad = n_blk * chunk
    if T_pad != T:
        # Pad the time axis with zeros; padded steps are masked in-kernel.
        xw = jnp.pad(xw, ((0, T_pad - T), (0, 0), (0, 0)))

    kernel = functools.partial(_lstm_chunk_kernel,
                               hidden_size=H, seq_len=T, chunk=chunk)

    h_n, c_n = pl.pallas_call(
        kernel,
        out_shape=(
            jax.ShapeDtypeStruct((B, H), jnp.float32),
            jax.ShapeDtypeStruct((B, H), jnp.float32),
        ),
        grid_spec=pltpu.PrefetchScalarGridSpec(
            num_scalar_prefetch=0,
            grid=(n_blk,),                       # time chunks, auto-pipelined
            in_specs=[
                pl.BlockSpec((chunk, B, G4), lambda t: (t, 0, 0)),   # xw chunk
                pl.BlockSpec((H, G4), lambda t: (0, 0)),             # W_hh^T
            ],
            out_specs=[
                pl.BlockSpec((B, H), lambda t: (0, 0)),              # h carry/out
                pl.BlockSpec((B, H), lambda t: (0, 0)),              # c carry/out
            ],
        ),
        compiler_params=pltpu.CompilerParams(
            # The recurrence is inherently sequential along time.
            dimension_semantics=("arbitrary",),
            # Explicit VMEM budget; safe for v7x (64 MiB) and v5e/v6e (128 MiB).
            vmem_limit_bytes=48 * 1024 * 1024),
    )(xw, whh_t)

    return h_n[None, ...], c_n[None, ...]


def _reference_forward(x, params):
    """Pure-JAX f32 reference matching PyTorch nn.LSTM (batch_first) semantics."""
    w_ih, w_hh = params["w_ih"], params["w_hh"]
    b = params["b_ih"] + params["b_hh"]
    H = w_hh.shape[1]
    B = x.shape[0]

    def step(carry, x_t):
        h, c = carry
        gates = x_t @ w_ih.T + h @ w_hh.T + b
        i = jax.nn.sigmoid(gates[:, 0 * H:1 * H])
        f = jax.nn.sigmoid(gates[:, 1 * H:2 * H])
        g = jnp.tanh(gates[:, 2 * H:3 * H])
        o = jax.nn.sigmoid(gates[:, 3 * H:4 * H])
        c_new = f * c + i * g
        h_new = o * jnp.tanh(c_new)
        return (h_new, c_new), None

    h0 = jnp.zeros((B, H), jnp.float32)
    c0 = jnp.zeros((B, H), jnp.float32)
    (h_n, c_n), _ = jax.lax.scan(step, (h0, c0), jnp.transpose(x, (1, 0, 2)))
    return h_n[None, ...], c_n[None, ...]


def init_params(key, input_size, hidden_size):
    """Uniform(-1/sqrt(H), 1/sqrt(H)) init, like PyTorch nn.LSTM."""
    ks = jax.random.split(key, 4)
    s = 1.0 / jnp.sqrt(hidden_size)
    u = lambda k, shape: jax.random.uniform(k, shape, jnp.float32, -s, s)
    return {
        "w_ih": u(ks[0], (4 * hidden_size, input_size)),
        "w_hh": u(ks[1], (4 * hidden_size, hidden_size)),
        "b_ih": u(ks[2], (4 * hidden_size,)),
        "b_hh": u(ks[3], (4 * hidden_size,)),
    }


if __name__ == "__main__":
    B, T, I, H = 2, 8, 16, 32

    key = jax.random.PRNGKey(0)
    k_x, k_p = jax.random.split(key, 2)
    x = jax.random.normal(k_x, (B, T, I), jnp.float32)
    params = init_params(k_p, I, H)

    # time_chunk=3 deliberately exercises the multi-chunk carried state AND the
    # ragged final chunk (T=8 -> chunks of 3, 3, 2 with in-kernel masking).
    h_n, c_n = encoder_rnn_forward(x, params, time_chunk=3)
    jax.block_until_ready((h_n, c_n))

    ref_h, ref_c = _reference_forward(x, params)
    assert h_n.shape == (1, B, H) and c_n.shape == (1, B, H)
    # bf16 MXU operands + bf16-stored xw with f32 state/accumulation -> relaxed
    # tolerance vs the f32 reference.
    assert jnp.allclose(h_n, ref_h, atol=5e-2, rtol=5e-2), \
        float(jnp.max(jnp.abs(h_n - ref_h)))
    assert jnp.allclose(c_n, ref_c, atol=5e-2, rtol=5e-2), \
        float(jnp.max(jnp.abs(c_n - ref_c)))

    print("KERNEL_OK")
</pallas_src>

<mosaic_0001>
module attributes {stable_mosaic.version = 11 : i64} {
  func.func @_lstm_chunk_kernel(%arg0: i32, %arg1: memref<3x2x128xbf16, #tpu.memory_space<vmem>>, %arg2: memref<32x128xbf16, #tpu.memory_space<vmem>>, %arg3: memref<2x32xf32, #tpu.memory_space<vmem>>, %arg4: memref<2x32xf32, #tpu.memory_space<vmem>>) attributes {dimension_semantics = [#tpu.dimension_semantics<arbitrary>], iteration_bounds = array<i64: 3>, scalar_prefetch = 0 : i64, scratch_operands = 0 : i64, tpu.core_type = #tpu.core_type<tc>, window_params = [{transform_indices = @transform_0, window_bounds = array<i64: 3, 2, 128>}, {pipeline_mode = #tpu.pipeline_mode<synchronous>, transform_indices = @transform_1, window_bounds = array<i64: 32, 128>}, {pipeline_mode = #tpu.pipeline_mode<synchronous>, transform_indices = @transform_2, window_bounds = array<i64: 2, 32>}, {pipeline_mode = #tpu.pipeline_mode<synchronous>, transform_indices = @transform_3, window_bounds = array<i64: 2, 32>}]} {
    %c0_i32 = arith.constant 0 : i32
    %0 = arith.cmpi eq, %arg0, %c0_i32 : i32
    %1 = arith.extui %0 : i1 to i32
    %c0_i32_0 = arith.constant 0 : i32
    %2 = arith.cmpi ne, %1, %c0_i32_0 : i32
    scf.if %2 {
      %cst_25 = arith.constant 0.000000e+00 : f32
      %93 = vector.broadcast %cst_25 : f32 to vector<2x32xf32>
      %c0_26 = arith.constant 0 : index
      %c0_27 = arith.constant 0 : index
      %94 = vector.load %arg3[%c0_26, %c0_27] : memref<2x32xf32, #tpu.memory_space<vmem>>, vector<2x32xf32>
      tpu.vector_store %arg3[%c0_26, %c0_27], %93 {strides = array<i32>} : memref<2x32xf32, #tpu.memory_space<vmem>>, vector<2x32xf32>,
      %cst_28 = arith.constant 0.000000e+00 : f32
      %95 = vector.broadcast %cst_28 : f32 to vector<2x32xf32>
      %c0_29 = arith.constant 0 : index
      %c0_30 = arith.constant 0 : index
      %96 = vector.load %arg4[%c0_29, %c0_30] : memref<2x32xf32, #tpu.memory_space<vmem>>, vector<2x32xf32>
      tpu.vector_store %arg4[%c0_29, %c0_30], %95 {strides = array<i32>} : memref<2x32xf32, #tpu.memory_space<vmem>>, vector<2x32xf32>,
    } else {
    }
    %c0 = arith.constant 0 : index
    %c0_1 = arith.constant 0 : index
    %3 = vector.load %arg2[%c0, %c0_1] : memref<32x128xbf16, #tpu.memory_space<vmem>>, vector<32x128xbf16>
    %c3_i32 = arith.constant 3 : i32
    %4 = arith.muli %arg0, %c3_i32 : i32
    %c0_2 = arith.constant 0 : index
    %c0_3 = arith.constant 0 : index
    %5 = vector.load %arg3[%c0_2, %c0_3] : memref<2x32xf32, #tpu.memory_space<vmem>>, vector<2x32xf32>
    %c0_4 = arith.constant 0 : index
    %c0_5 = arith.constant 0 : index
    %6 = vector.load %arg4[%c0_4, %c0_5] : memref<2x32xf32, #tpu.memory_space<vmem>>, vector<2x32xf32>
    %c0_i32_6 = arith.constant 0 : i32
    %7 = arith.index_cast %c0_i32_6 : i32 to index
    %c0_7 = arith.constant 0 : index
    %c0_8 = arith.constant 0 : index
    %8 = vector.load %arg1[%7, %c0_7, %c0_8] : memref<3x2x128xbf16, #tpu.memory_space<vmem>>, vector<1x2x128xbf16>
    %9 = vector.shape_cast %8 : vector<1x2x128xbf16> to vector<2x128xbf16>
    %10 = arith.extf %9 : vector<2x128xbf16> to vector<2x128xf32>
    %11 = arith.truncf %5 : vector<2x32xf32> to vector<2x32xbf16>
    %cst = arith.constant dense<0.000000e+00> : vector<2x128xf32>
    %12 = tpu.matmul %11, %3, %cst {dimension_numbers = #tpu.dot_dimension_numbers<[1], [0], [0], [1], [0, 0, 1, 1], [], []>} : vector<2x32xbf16>, vector<32x128xbf16>, vector<2x128xf32> -> vector<2x128xf32>
    %13 = arith.addf %10, %12 : vector<2x128xf32>
    %14 = arith.negf %13 : vector<2x128xf32>
    %15 = math.exp %14 : vector<2x128xf32>
    %cst_9 = arith.constant 1.000000e+00 : f32
    %16 = vector.broadcast %cst_9 : f32 to vector<2x128xf32>
    %17 = arith.addf %16, %15 : vector<2x128xf32>
    %18 = arith.divf %16, %17 : vector<2x128xf32>
    %19 = math.tanh %13 : vector<2x128xf32>
    %20 = vector.extract_strided_slice %18 {offsets = [0, 0], sizes = [2, 32], strides = [1, 1]} : vector<2x128xf32> to vector<2x32xf32>
    %21 = vector.extract_strided_slice %18 {offsets = [0, 32], sizes = [2, 32], strides = [1, 1]} : vector<2x128xf32> to vector<2x32xf32>
    %22 = vector.extract_strided_slice %19 {offsets = [0, 64], sizes = [2, 32], strides = [1, 1]} : vector<2x128xf32> to vector<2x32xf32>
    %23 = vector.extract_strided_slice %18 {offsets = [0, 96], sizes = [2, 32], strides = [1, 1]} : vector<2x128xf32> to vector<2x32xf32>
    %24 = arith.mulf %21, %6 : vector<2x32xf32>
    %25 = arith.mulf %20, %22 : vector<2x32xf32>
    %26 = arith.addf %24, %25 : vector<2x32xf32>
    %27 = math.tanh %26 : vector<2x32xf32>
    %28 = arith.mulf %23, %27 : vector<2x32xf32>
    %29 = arith.addi %4, %c0_i32_6 : i32
    %30 = vector.broadcast %29 : i32 to vector<2x32xi32>
    %c8_i32 = arith.constant 8 : i32
    %31 = vector.broadcast %c8_i32 : i32 to vector<2x32xi32>
    %32 = arith.cmpi slt, %30, %31 : vector<2x32xi32>
    %33 = arith.select %32, %28, %5 : vector<2x32xi1>, vector<2x32xf32>
    %34 = arith.select %32, %26, %6 : vector<2x32xi1>, vector<2x32xf32>
    %c1_i32 = arith.constant 1 : i32
    %35 = arith.index_cast %c1_i32 : i32 to index
    %c0_10 = arith.constant 0 : index
    %c0_11 = arith.constant 0 : index
    %36 = vector.load %arg1[%35, %c0_10, %c0_11] : memref<3x2x128xbf16, #tpu.memory_space<vmem>>, vector<1x2x128xbf16>
    %37 = vector.shape_cast %36 : vector<1x2x128xbf16> to vector<2x128xbf16>
    %38 = arith.extf %37 : vector<2x128xbf16> to vector<2x128xf32>
    %39 = arith.truncf %33 : vector<2x32xf32> to vector<2x32xbf16>
    %cst_12 = arith.constant dense<0.000000e+00> : vector<2x128xf32>
    %40 = tpu.matmul %39, %3, %cst_12 {dimension_numbers = #tpu.dot_dimension_numbers<[1], [0], [0], [1], [0, 0, 1, 1], [], []>} : vector<2x32xbf16>, vector<32x128xbf16>, vector<2x128xf32> -> vector<2x128xf32>
    %41 = arith.addf %38, %40 : vector<2x128xf32>
    %42 = arith.negf %41 : vector<2x128xf32>
    %43 = math.exp %42 : vector<2x128xf32>
    %cst_13 = arith.constant 1.000000e+00 : f32
    %44 = vector.broadcast %cst_13 : f32 to vector<2x128xf32>
    %45 = arith.addf %44, %43 : vector<2x128xf32>
    %46 = arith.divf %44, %45 : vector<2x128xf32>
    %47 = math.tanh %41 : vector<2x128xf32>
    %48 = vector.extract_strided_slice %46 {offsets = [0, 0], sizes = [2, 32], strides = [1, 1]} : vector<2x128xf32> to vector<2x32xf32>
    %49 = vector.extract_strided_slice %46 {offsets = [0, 32], sizes = [2, 32], strides = [1, 1]} : vector<2x128xf32> to vector<2x32xf32>
    %50 = vector.extract_strided_slice %47 {offsets = [0, 64], sizes = [2, 32], strides = [1, 1]} : vector<2x128xf32> to vector<2x32xf32>
    %51 = vector.extract_strided_slice %46 {offsets = [0, 96], sizes = [2, 32], strides = [1, 1]} : vector<2x128xf32> to vector<2x32xf32>
    %52 = arith.mulf %49, %34 : vector<2x32xf32>
    %53 = arith.mulf %48, %50 : vector<2x32xf32>
    %54 = arith.addf %52, %53 : vector<2x32xf32>
    %55 = math.tanh %54 : vector<2x32xf32>
    %56 = arith.mulf %51, %55 : vector<2x32xf32>
    %57 = arith.addi %4, %c1_i32 : i32
    %58 = vector.broadcast %57 : i32 to vector<2x32xi32>
    %c8_i32_14 = arith.constant 8 : i32
    %59 = vector.broadcast %c8_i32_14 : i32 to vector<2x32xi32>
    %60 = arith.cmpi slt, %58, %59 : vector<2x32xi32>
    %61 = arith.select %60, %56, %33 : vector<2x32xi1>, vector<2x32xf32>
    %62 = arith.select %60, %54, %34 : vector<2x32xi1>, vector<2x32xf32>
    %c2_i32 = arith.constant 2 : i32
    %63 = arith.index_cast %c2_i32 : i32 to index
    %c0_15 = arith.constant 0 : index
    %c0_16 = arith.constant 0 : index
    %64 = vector.load %arg1[%63, %c0_15, %c0_16] : memref<3x2x128xbf16, #tpu.memory_space<vmem>>, vector<1x2x128xbf16>
    %65 = vector.shape_cast %64 : vector<1x2x128xbf16> to vector<2x128xbf16>
    %66 = arith.extf %65 : vector<2x128xbf16> to vector<2x128xf32>
    %67 = arith.truncf %61 : vector<2x32xf32> to vector<2x32xbf16>
    %cst_17 = arith.constant dense<0.000000e+00> : vector<2x128xf32>
    %68 = tpu.matmul %67, %3, %cst_17 {dimension_numbers = #tpu.dot_dimension_numbers<[1], [0], [0], [1], [0, 0, 1, 1], [], []>} : vector<2x32xbf16>, vector<32x128xbf16>, vector<2x128xf32> -> vector<2x128xf32>
    %69 = arith.addf %66, %68 : vector<2x128xf32>
    %70 = arith.negf %69 : vector<2x128xf32>
    %71 = math.exp %70 : vector<2x128xf32>
    %cst_18 = arith.constant 1.000000e+00 : f32
    %72 = vector.broadcast %cst_18 : f32 to vector<2x128xf32>
    %73 = arith.addf %72, %71 : vector<2x128xf32>
    %74 = arith.divf %72, %73 : vector<2x128xf32>
    %75 = math.tanh %69 : vector<2x128xf32>
    %76 = vector.extract_strided_slice %74 {offsets = [0, 0], sizes = [2, 32], strides = [1, 1]} : vector<2x128xf32> to vector<2x32xf32>
    %77 = vector.extract_strided_slice %74 {offsets = [0, 32], sizes = [2, 32], strides = [1, 1]} : vector<2x128xf32> to vector<2x32xf32>
    %78 = vector.extract_strided_slice %75 {offsets = [0, 64], sizes = [2, 32], strides = [1, 1]} : vector<2x128xf32> to vector<2x32xf32>
    %79 = vector.extract_strided_slice %74 {offsets = [0, 96], sizes = [2, 32], strides = [1, 1]} : vector<2x128xf32> to vector<2x32xf32>
    %80 = arith.mulf %77, %62 : vector<2x32xf32>
    %81 = arith.mulf %76, %78 : vector<2x32xf32>
    %82 = arith.addf %80, %81 : vector<2x32xf32>
    %83 = math.tanh %82 : vector<2x32xf32>
    %84 = arith.mulf %79, %83 : vector<2x32xf32>
    %85 = arith.addi %4, %c2_i32 : i32
    %86 = vector.broadcast %85 : i32 to vector<2x32xi32>
    %c8_i32_19 = arith.constant 8 : i32
    %87 = vector.broadcast %c8_i32_19 : i32 to vector<2x32xi32>
    %88 = arith.cmpi slt, %86, %87 : vector<2x32xi32>
    %89 = arith.select %88, %84, %61 : vector<2x32xi1>, vector<2x32xf32>
    %90 = arith.select %88, %82, %62 : vector<2x32xi1>, vector<2x32xf32>
    %c3_i32_20 = arith.constant 3 : i32
    %c0_21 = arith.constant 0 : index
    %c0_22 = arith.constant 0 : index
    %91 = vector.load %arg3[%c0_21, %c0_22] : memref<2x32xf32, #tpu.memory_space<vmem>>, vector<2x32xf32>
    tpu.vector_store %arg3[%c0_21, %c0_22], %89 {strides = array<i32>} : memref<2x32xf32, #tpu.memory_space<vmem>>, vector<2x32xf32>,
    %c0_23 = arith.constant 0 : index
    %c0_24 = arith.constant 0 : index
    %92 = vector.load %arg4[%c0_23, %c0_24] : memref<2x32xf32, #tpu.memory_space<vmem>>, vector<2x32xf32>
    tpu.vector_store %arg4[%c0_23, %c0_24], %90 {strides = array<i32>} : memref<2x32xf32, #tpu.memory_space<vmem>>, vector<2x32xf32>,
    return
  }
  func.func @transform_0(%arg0: i32) -> (i32, i32, i32) {
    %c0_i32 = arith.constant 0 : i32
    %c0_i32_0 = arith.constant 0 : i32
    %c0_i32_1 = arith.constant 0 : i32
    return %arg0, %c0_i32, %c0_i32_0 : i32, i32, i32
  }
  func.func @transform_1(%arg0: i32) -> (i32, i32) {
    %c0_i32 = arith.constant 0 : i32
    %c0_i32_0 = arith.constant 0 : i32
    %c0_i32_1 = arith.constant 0 : i32
    return %c0_i32, %c0_i32_0 : i32, i32
  }
  func.func @transform_2(%arg0: i32) -> (i32, i32) {
    %c0_i32 = arith.constant 0 : i32
    %c0_i32_0 = arith.constant 0 : i32
    %c0_i32_1 = arith.constant 0 : i32
    return %c0_i32, %c0_i32_0 : i32, i32
  }
  func.func @transform_3(%arg0: i32) -> (i32, i32) {
    %c0_i32 = arith.constant 0 : i32
    %c0_i32_0 = arith.constant 0 : i32
    %c0_i32_1 = arith.constant 0 : i32
    return %c0_i32, %c0_i32_0 : i32, i32
  }
}

</mosaic_0001>

<llo_original>
// kernel: tpu_custom_call.1
$region0: #{tpu_custom_call.1}
  #allocation0 [shape = 'u32[]', space=smem, size = 0x4, offset = 0x4, fixed_abs, tag = 'smem constant byte address 0x4 - core index']
  #allocation1 [shape = 'u32[72,128]{1,0:T(1,128)}', space=vmem, size = 0x9000, scoped, tag = 'internal scratch']
  %s0 = inlined_call_operand.hbm [shape: bf16[9,2,128], index: 0, kind: input, shape index: {}]
  %s1 = inlined_call_operand.hbm [shape: bf16[32,128], index: 1, kind: input, shape index: {}]
  %s2 = inlined_call_operand.hbm [shape: f32[2,32], index: 2, kind: output, shape index: {0}]
  %s3 = inlined_call_operand.hbm [shape: f32[2,32], index: 3, kind: output, shape index: {1}]
  %4 = xla_tuple %s2, %s3
  %s5 = sld [smem:[#allocation0]]
  $region61: #{tpu_custom_call.1} parent=0
    _
  %s7 = ssub.s32 1, %s5
  %s8 = scalar_select 0, %s7, %s5
  $region1: #{tpu_custom_call.1} parent=0
    #allocation2 [shape = 'u8[3072]{0}', space=vmem, size = 0xc00, scoped, tag = 'input window, operand 0']
    #allocation3 [shape = 's32[2]{0}', space=sflag, size = 0x8, scoped, tag = 'scoped memory for tpu_custom_call.1']
    #allocation4 [shape = 's32[2]{0}', space=sflag, size = 0x8, scoped, tag = 'scoped memory for tpu_custom_call.1']
    #allocation5 [shape = 'u8[8192]{0}', space=vmem, size = 0x2000, scoped, tag = 'input window, operand 1, single buffered']
    #allocation6 [shape = 's32[1]{0}', space=sflag, size = 0x4, scoped, tag = 'scoped memory for tpu_custom_call.1']
    #allocation7 [shape = 'u8[1024]{0}', space=vmem, size = 0x400, scoped, tag = 'output window, operand 0, single buffered']
    #allocation8 [shape = 'u8[1024]{0}', space=vmem, size = 0x400, scoped, tag = 'output window, operand 1, single buffered']
    #allocation9 [shape = 's32[1]{0}', space=sflag, size = 0x4, scoped, tag = 'scoped memory for tpu_custom_call.1']
    %9 = vsyncpa [#allocation3], 0
    %s10 = scalar_lea.sflag [#allocation3], 1
    %11 = vsyncpa %s10, 0
    %12 = vsyncpa [#allocation6], 0
    %13 = vsyncpa [#allocation4], 0
    %14 = vsyncpa [#allocation9], 0
    loop: start=0, step=1, limit=5
    $region2: #{tpu_custom_call.1} parent=1 // loop_pre_header
      _
    $region3: #{tpu_custom_call.1} parent=1 // loop_header
      %s16 = sphi 0, %s20
      %p17 = scmp.ge.s32.totalorder %s16, 5
      %s26 = sphi 0, %s28
      %s29 = sphi 0, %s26
      %s30 = sphi 0, %s29
      %s46 = sphi 0, %s30
      %s50 = sphi 0, %s50
      %s52 = sphi 0, %s50
      %s53 = sphi 0, %s52
      %s67 = sphi 0, %s53
      %s71 = sphi 0, %s71
      %s73 = sphi 0, %s71
      %s74 = sphi 0, %s73
      %s88 = sphi 0, %s74
      %s92 = sphi 0, %s92
      %s94 = sphi 0, %s92
      %s95 = sphi 0, %s94
      %s109 = sphi 0, %s95
    $region4: #{tpu_custom_call.1} parent=1 // loop_header_branch
      %19 = sbr.rel (%p17) target = $region8
    $region5: #{tpu_custom_call.1} parent=1 // loop_body
      %s21 = ssub.s32 %s16, 1
      %s22 = ssub.s32 %s16, 2
      %s23 = sadd.s32 %s16, 1
      %s24 = ssub.s32 %s16, %s23
      %p25 = scmp.eq.s32.totalorder %s24, 0
      %s27 = sadd.s32 %s26, 1
      %s28 = scalar_select %p25, %s26, %s27
      %p31 = pneg %p25
      %p32 = scmp.eq.s32.totalorder %s16, 2
      %p33 = por %p31, %p32
      %p34 = scmp.ne.s32.totalorder %s26, %s29
      %p35 = scmp.eq.s32.totalorder %s16, 0
      %p36 = por %p34, %p35
      %p37 = scmp.ne.s32.totalorder %s26, %s29
      %p38 = scmp.eq.s32.totalorder %s21, 2
      %p39 = por %p37, %p38
      %p40 = scmp.ne.s32.totalorder %s29, %s30
      %p41 = scmp.eq.s32.totalorder %s21, 0
      %p42 = por %p40, %p41
      %p43 = scmp.ne.s32.totalorder %s29, %s30
      %p44 = scmp.eq.s32.totalorder %s22, 2
      %p45 = por %p43, %p44
      %p47 = scmp.ne.s32.totalorder %s30, %s46
      %p48 = scmp.eq.s32.totalorder %s22, 0
      %p49 = por %p47, %p48
      %s51 = sadd.s32 %s50, 1
      %p54 = scmp.eq.s32.totalorder %s16, 2
      %p55 = scmp.ne.s32.totalorder %s50, %s52
      %p56 = scmp.eq.s32.totalorder %s16, 0
      %p57 = por %p55, %p56
      %p58 = scmp.ne.s32.totalorder %s50, %s52
      %p59 = scmp.eq.s32.totalorder %s21, 2
      %p60 = por %p58, %p59
      %p61 = scmp.ne.s32.totalorder %s52, %s53
      %p62 = scmp.eq.s32.totalorder %s21, 0
      %p63 = por %p61, %p62
      %p64 = scmp.ne.s32.totalorder %s52, %s53
      %p65 = scmp.eq.s32.totalorder %s22, 2
      %p66 = por %p64, %p65
      %p68 = scmp.ne.s32.totalorder %s53, %s67
      %p69 = scmp.eq.s32.totalorder %s22, 0
      %p70 = por %p68, %p69
      %s72 = sadd.s32 %s71, 1
      %p75 = scmp.eq.s32.totalorder %s16, 2
      %p76 = scmp.ne.s32.totalorder %s71, %s73
      %p77 = scmp.eq.s32.totalorder %s16, 0
      %p78 = por %p76, %p77
      %p79 = scmp.ne.s32.totalorder %s71, %s73
      %p80 = scmp.eq.s32.totalorder %s21, 2
      %p81 = por %p79, %p80
      %p82 = scmp.ne.s32.totalorder %s73, %s74
      %p83 = scmp.eq.s32.totalorder %s21, 0
      %p84 = por %p82, %p83
      %p85 = scmp.ne.s32.totalorder %s73, %s74
      %p86 = scmp.eq.s32.totalorder %s22, 2
      %p87 = por %p85, %p86
      %p89 = scmp.ne.s32.totalorder %s74, %s88
      %p90 = scmp.eq.s32.totalorder %s22, 0
      %p91 = por %p89, %p90
      %s93 = sadd.s32 %s92, 1
      %p96 = scmp.eq.s32.totalorder %s16, 2
      %p97 = scmp.ne.s32.totalorder %s92, %s94
      %p98 = scmp.eq.s32.totalorder %s16, 0
      %p99 = por %p97, %p98
      %p100 = scmp.ne.s32.totalorder %s92, %s94
      %p101 = scmp.eq.s32.totalorder %s21, 2
      %p102 = por %p100, %p101
      %p103 = scmp.ne.s32.totalorder %s94, %s95
      %p104 = scmp.eq.s32.totalorder %s21, 0
      %p105 = por %p103, %p104
      %p106 = scmp.ne.s32.totalorder %s94, %s95
      %p107 = scmp.eq.s32.totalorder %s22, 2
      %p108 = por %p106, %p107
      %p110 = scmp.ne.s32.totalorder %s95, %s109
      %p111 = scmp.eq.s32.totalorder %s22, 0
      %p112 = por %p110, %p111
      %p113 = scmp.le.s32.totalorder 1, %s16
      %p114 = scmp.lt.s32.totalorder %s16, 4
      %p115 = pnand %p113, %p114
      %p116 = pneg %p115
      // Predicated region
      $region9: #{tpu_custom_call.1} parent=5 // pred_check
        _
      $region10: #{tpu_custom_call.1} parent=5 // pred_check_branch
        %118 = sbr.rel (%p115) target = $region12
      $region11: #{tpu_custom_call.1} parent=5 // pred_region
        %s119 = ssub.s32 %s16, 1
        // Predicated region
        $region13: #{tpu_custom_call.1} parent=11 // pred_check
          %p120 = pneg %p63
        $region14: #{tpu_custom_call.1} parent=11 // pred_check_branch
          %122 = sbr.rel (%p120) target = $region16
        $region15: #{tpu_custom_call.1} parent=11 // pred_region
          %124 = vsyncadd [#allocation6], 0
          %s125 = sshll.u32 %s1, 4
          %s126 = int_to_ptr.hbm [resolvable:$true] %s125
          %s127 = sshll.u32 [#allocation5], 4
          %s128 = int_to_ptr.vmem [resolvable:$true] %s127
          %133 = dma.hbm_to_vmem [thread:$0]  %s126, 256, %s128, [#allocation6], 64, 64, 4
        $region16: #{tpu_custom_call.1} parent=11 // pred_fallthru
          _
      $region12: #{tpu_custom_call.1} parent=5 // pred_fallthru
        _
      %p134 = scmp.lt.s32.totalorder %s16, 3
      // Predicated region
      $region17: #{tpu_custom_call.1} parent=5 // pred_check
        %p135 = pneg %p134
      $region18: #{tpu_custom_call.1} parent=5 // pred_check_branch
        %137 = sbr.rel (%p135) target = $region20
      $region19: #{tpu_custom_call.1} parent=5 // pred_region
        // Predicated region
        $region21: #{tpu_custom_call.1} parent=19 // pred_check
          %p138 = pneg %p36
        $region22: #{tpu_custom_call.1} parent=19 // pred_check_branch
          %140 = sbr.rel (%p138) target = $region24
        $region23: #{tpu_custom_call.1} parent=19 // pred_region
          %s141 = sand.u32 %s26, 1
          %s142 = scalar_lea.sflag [#allocation3], %s141
          %s143 = sand.u32 %s26, 1
          %s144 = smul.addr %s143, 3
          %s145 = scalar_lea.vmem [#allocation2], %s144
          %s146 = smul.u32 3, %s16
          %148 = vsyncadd %s142, 0
          %s149 = scalar_lea.hbm %s0, %s146
          %s150 = sshll.u32 %s149, 4
          %s151 = int_to_ptr.hbm [resolvable:$true] %s150
          %s152 = sshll.u32 %s145, 4
          %s153 = int_to_ptr.vmem [resolvable:$true] %s152
          %158 = dma.hbm_to_vmem [thread:$0]  %s151, 48, %s153, %s142, 16, 16, 1
        $region24: #{tpu_custom_call.1} parent=19 // pred_fallthru
          _
      $region20: #{tpu_custom_call.1} parent=5 // pred_fallthru
        _
      %p159 = scmp.le.s32.totalorder 1, %s16
      %p160 = scmp.lt.s32.totalorder %s16, 4
      %p161 = pnand %p159, %p160
      %p162 = pneg %p161
      // Predicated region
      $region25: #{tpu_custom_call.1} parent=5 // pred_check
        _
      $region26: #{tpu_custom_call.1} parent=5 // pred_check_branch
        %164 = sbr.rel (%p161) target = $region28
      $region27: #{tpu_custom_call.1} parent=5 // pred_region
        %s165 = ssub.s32 %s16, 1
        %s166 = sand.u32 %s29, 1
        %s167 = scalar_lea.sflag [#allocation3], %s166
        %s168 = sand.u32 %s29, 1
        %s169 = smul.addr %s168, 3
        %s170 = scalar_lea.vmem [#allocation2], %s169
        // Predicated region
        $region29: #{tpu_custom_call.1} parent=27 // pred_check
          %p171 = pneg %p42
        $region30: #{tpu_custom_call.1} parent=27 // pred_check_branch
          %173 = sbr.rel (%p171) target = $region32
        $region31: #{tpu_custom_call.1} parent=27 // pred_region
          %175 = dma.done %s167, 48
        $region32: #{tpu_custom_call.1} parent=27 // pred_fallthru
          _
        // Predicated region
        $region33: #{tpu_custom_call.1} parent=27 // pred_check
          %p176 = pneg %p63
        $region34: #{tpu_custom_call.1} parent=27 // pred_check_branch
          %178 = sbr.rel (%p176) target = $region36
        $region35: #{tpu_custom_call.1} parent=27 // pred_region
          %180 = dma.done [#allocation6], 256
        $region36: #{tpu_custom_call.1} parent=27 // pred_fallthru
          _
        %s181 = sand.u32 %s29, 1
        %s182 = scalar_lea.sflag [#allocation3], %s181
        %s183 = sand.u32 %s29, 1
        %s184 = smul.addr %s183, 3
        %s185 = scalar_lea.vmem [#allocation2], %s184
        %p186 = pneg %p42
        %p187 = pneg %p39
        %p188 = pneg %p63
        %p189 = pneg %p60
        %p190 = pneg %p84
        %p191 = pneg %p81
        %p192 = pneg %p105
        %p193 = pneg %p102
        %s194 = smul.u32 3, %s21
        %p196 = scmp.eq.s32.totalorder %s21, 0
        // Predicated region
        $region37: #{tpu_custom_call.1} parent=27 // pred_check
          %p197 = pneg %p196
        $region38: #{tpu_custom_call.1} parent=27 // pred_check_branch
          %199 = sbr.rel (%p197) target = $region40
        $region39: #{tpu_custom_call.1} parent=27 // pred_region
          %vm200 = vcmask 254976
          %201 = vst.msk [vmem:[#allocation7] sm:$0x3] %vm200, 0.0
          %202 = vst.msk [vmem:[#allocation8] sm:$0x3] %vm200, 0.0
        $region40: #{tpu_custom_call.1} parent=27 // pred_fallthru
          _
        %v203 = vld [vmem:[#allocation5] sm:$0xf]
        %v204 = vld [vmem:[#allocation5 + $0x4] sm:$0xf]
        %v205 = vld [vmem:[#allocation5 + $0x8] sm:$0xf]
        %v206 = vld [vmem:[#allocation5 + $0xc] sm:$0xf]
        %s207 = smul.u32 %s21, 3
        %v208 = vld [vmem:[#allocation7] sm:$0x3]
        %v209 = vld [vmem:[#allocation8] sm:$0x3]
        %v210 = vld [vmem:[%s170] sm:$0x1]
        %v211 = vunpack.c.l.bf16 %v210
        %v212 = vpack.c.bf16 %v208, %v208
        %v217 = vunpack.c.l.b16 %v203
        %v218 = vunpack.c.l.b16 %v204
        %v219 = vunpack.c.l.b16 %v205
        %v220 = vunpack.c.l.b16 %v206
        %v221 = vpack.c.b16 %v218, %v217
        %v222 = vpack.c.b16 %v220, %v219
        %vm225 = vcmask 261120
        %v227 = vsel %vm225, %v212, 0
        %229 = vmatpush.bf16.msra.mxu0 0
        %230 = vmatpush.bf16.msra.mxu0 0
        %231 = vmatpush.bf16.msra.mxu0 0
        %232 = vmatpush.bf16.msra.mxu0 0
        %233 = vmatpush.bf16.msra.mxu0 0
        %234 = vmatpush.bf16.msra.mxu0 0
        %235 = vmatpush.bf16.msra.mxu0 %v222
        %236 = vmatpush.bf16.msra.mxu0 %v221
        %237 = vmatmul.bf16.gmra.mxu0 %v227
        %v238 = vpop.f32.mrf.mxu0
        %v239 = vadd.f32 0.0, %v238
        %v240 = vpop.f32.mrf.mxu0
        %241 = vdwg.mxu0
        %v242 = vadd.f32 %v211, %v239
        %v243 = vxor.u32 %v242, 2147483648
        %v244 = vmul.f32 %v243, 1.442695
        %v245 = vpow.pop %v244
        %v246 = vadd.f32 %v245, 1.0
        %v247 = vrcp.pop %v246
        %v248 = vmul.f32 %v246, %v247
        %v249 = vsub.f32 1.0, %v248
        %v250 = vmul.f32 %v247, %v249
        %v251 = vadd.f32 %v247, %v250
        %vm252 = vweird.f32 %v246
        %vm253 = vweird.f32 %v247
        %vm254 = vmor %vm252, %vm253
        %v255 = vsel %vm254, %v247, %v251
        %v256 = vand.u32 2147483647, %v246
        %vm257 = vcmp.eq.f32.partialorder %v256, 8.507059e+37
        %v258 = vand.u32 %v246, 2147483648
        %v259 = vor.u32 1.1754944e-38, %v258
        %v260 = vsel %vm257, %v259, %v255
        %v261 = vmul.f32 1.0, %v260
        %v262 = vtanh.pop %v242
        %264 = vrot.lane.b32.xlu0 %v209, 32
        %v265 = vpop.permute.xlu0 %264
        %v267 = vmul.f32 %v261, %v265
        %269 = vrot.lane.b32.xlu0 %v262, 64
        %v270 = vpop.permute.xlu0 %269
        %v272 = vmul.f32 %v261, %v270
        %274 = vrot.lane.b32.xlu0 %v272, 32
        %v275 = vpop.permute.xlu0 %274
        %v277 = vadd.f32 %v267, %v275
        %v278 = vtanh.pop %v277
        %280 = vrot.lane.b32.xlu0 %v278, 64
        %v281 = vpop.permute.xlu0 %280
        %v283 = vmul.f32 %v261, %v281
        %v284 = vstv %s207
        %vm285 = vcmp.lt.s32.totalorder %v284, 8
        %287 = vrot.lane.b32.xlu0 %v208, 96
        %v288 = vpop.permute.xlu0 %287
        %v290 = vsel %vm285, %v283, %v288
        %v291 = vsel %vm285, %v277, %v265
        %s292 = scalar_lea.vmem %s170, 1 [#allocation2]
        %v293 = vld [vmem:[%s292] sm:$0x1]
        %v294 = vunpack.c.l.bf16 %v293
        %v295 = vpack.c.bf16 %v290, %v290
        %297 = vrot.lane.b32.xlu0 %v295, 32
        %v298 = vpop.permute.xlu0 %297
        %v300 = vsel %vm225, %v298, 0
        %302 = vmatpush.bf16.msra.mxu0 0
        %303 = vmatpush.bf16.msra.mxu0 0
        %304 = vmatpush.bf16.msra.mxu0 0
        %305 = vmatpush.bf16.msra.mxu0 0
        %306 = vmatpush.bf16.msra.mxu0 0
        %307 = vmatpush.bf16.msra.mxu0 0
        %308 = vmatpush.bf16.msra.mxu0 %v222
        %309 = vmatpush.bf16.msra.mxu0 %v221
        %310 = vmatmul.bf16.gmra.mxu0 %v300
        %v311 = vpop.f32.mrf.mxu0
        %v312 = vadd.f32 0.0, %v311
        %v313 = vpop.f32.mrf.mxu0
        %314 = vdwg.mxu0
        %v315 = vadd.f32 %v294, %v312
        %v316 = vxor.u32 %v315, 2147483648
        %v317 = vmul.f32 %v316, 1.442695
        %v318 = vpow.pop %v317
        %v319 = vadd.f32 %v318, 1.0
        %v320 = vrcp.pop %v319
        %v321 = vmul.f32 %v319, %v320
        %v322 = vsub.f32 1.0, %v321
        %v323 = vmul.f32 %v320, %v322
        %v324 = vadd.f32 %v320, %v323
        %vm325 = vweird.f32 %v319
        %vm326 = vweird.f32 %v320
        %vm327 = vmor %vm325, %vm326
        %v328 = vsel %vm327, %v320, %v324
        %v329 = vand.u32 2147483647, %v319
        %vm330 = vcmp.eq.f32.partialorder %v329, 8.507059e+37
        %v331 = vand.u32 %v319, 2147483648
        %v332 = vor.u32 1.1754944e-38, %v331
        %v333 = vsel %vm330, %v332, %v328
        %v334 = vmul.f32 1.0, %v333
        %v335 = vtanh.pop %v315
        %v336 = vmul.f32 %v334, %v291
        %338 = vrot.lane.b32.xlu0 %v335, 64
        %v339 = vpop.permute.xlu0 %338
        %v341 = vmul.f32 %v334, %v339
        %343 = vrot.lane.b32.xlu0 %v341, 32
        %v344 = vpop.permute.xlu0 %343
        %v346 = vadd.f32 %v336, %v344
        %v347 = vtanh.pop %v346
        %349 = vrot.lane.b32.xlu0 %v347, 64
        %v350 = vpop.permute.xlu0 %349
        %v352 = vmul.f32 %v334, %v350
        %s353 = sadd.s32 %s207, 1
        %v354 = vstv %s353
        %vm355 = vcmp.lt.s32.totalorder %v354, 8
        %v356 = vsel %vm355, %v352, %v290
        %v357 = vsel %vm355, %v346, %v291
        %s358 = scalar_lea.vmem %s170, 2 [#allocation2]
        %v359 = vld [vmem:[%s358] sm:$0x1]
        %v360 = vunpack.c.l.bf16 %v359
        %v361 = vpack.c.bf16 %v356, %v356
        %363 = vrot.lane.b32.xlu0 %v361, 32
        %v364 = vpop.permute.xlu0 %363
        %v366 = vsel %vm225, %v364, 0
        %368 = vmatpush.bf16.msra.mxu0 0
        %369 = vmatpush.bf16.msra.mxu0 0
        %370 = vmatpush.bf16.msra.mxu0 0
        %371 = vmatpush.bf16.msra.mxu0 0
        %372 = vmatpush.bf16.msra.mxu0 0
        %373 = vmatpush.bf16.msra.mxu0 0
        %374 = vmatpush.bf16.msra.mxu0 %v222
        %375 = vmatpush.bf16.msra.mxu0 %v221
        %376 = vmatmul.bf16.gmra.mxu0 %v366
        %v377 = vpop.f32.mrf.mxu0
        %v378 = vadd.f32 0.0, %v377
        %v379 = vpop.f32.mrf.mxu0
        %380 = vdwg.mxu0
        %v381 = vadd.f32 %v360, %v378
        %v382 = vxor.u32 %v381, 2147483648
        %v383 = vmul.f32 %v382, 1.442695
        %v384 = vpow.pop %v383
        %v385 = vadd.f32 %v384, 1.0
        %v386 = vrcp.pop %v385
        %v387 = vmul.f32 %v385, %v386
        %v388 = vsub.f32 1.0, %v387
        %v389 = vmul.f32 %v386, %v388
        %v390 = vadd.f32 %v386, %v389
        %vm391 = vweird.f32 %v385
        %vm392 = vweird.f32 %v386
        %vm393 = vmor %vm391, %vm392
        %v394 = vsel %vm393, %v386, %v390
        %v395 = vand.u32 2147483647, %v385
        %vm396 = vcmp.eq.f32.partialorder %v395, 8.507059e+37
        %v397 = vand.u32 %v385, 2147483648
        %v398 = vor.u32 1.1754944e-38, %v397
        %v399 = vsel %vm396, %v398, %v394
        %v400 = vmul.f32 1.0, %v399
        %v401 = vtanh.pop %v381
        %v402 = vmul.f32 %v400, %v357
        %404 = vrot.lane.b32.xlu0 %v401, 64
        %v405 = vpop.permute.xlu0 %404
        %v407 = vmul.f32 %v400, %v405
        %409 = vrot.lane.b32.xlu0 %v407, 32
        %v410 = vpop.permute.xlu0 %409
        %v412 = vadd.f32 %v402, %v410
        %v413 = vtanh.pop %v412
        %415 = vrot.lane.b32.xlu0 %v413, 64
        %v416 = vpop.permute.xlu0 %415
        %v418 = vmul.f32 %v400, %v416
        %s419 = sadd.s32 %s207, 2
        %v420 = vstv %s419
        %vm421 = vcmp.lt.s32.totalorder %v420, 8
        %v422 = vsel %vm421, %v418, %v356
        %v423 = vsel %vm421, %v412, %v357
        %425 = vst [vmem:[#allocation1] ss:$4 sm:$0xff] %v422
        %v426 = vld.sshfl [vmem:[#allocation1] sm:$0xff pattern:$0x73625140]
        %427 = vrot.lane.b32.xlu0 %v426, 32
        %v428 = vpop.permute.xlu0 %427
        %vm430 = vcmask 254976
        %431 = vst.msk [vmem:[#allocation7] sm:$0x3] %vm430, %v428
        %433 = vst [vmem:[#allocation1] ss:$4 sm:$0xff] %v423
        %v434 = vld.sshfl [vmem:[#allocation1] sm:$0xff pattern:$0x73625140]
        %435 = vrot.lane.b32.xlu0 %v434, 96
        %v436 = vpop.permute.xlu0 %435
        %438 = vst.msk [vmem:[#allocation8] sm:$0x3] %vm430, %v436
        // Predicated region
        $region41: #{tpu_custom_call.1} parent=27 // pred_check
          %p439 = pneg %p81
        $region42: #{tpu_custom_call.1} parent=27 // pred_check_branch
          %441 = sbr.rel (%p439) target = $region44
        $region43: #{tpu_custom_call.1} parent=27 // pred_region
          %443 = vsyncadd [#allocation4], 0
          %s445 = sshll.u32 [#allocation7], 4
          %s446 = int_to_ptr.vmem [resolvable:$true] %s445
          %s447 = sshll.u32 %s2, 4
          %s448 = int_to_ptr.hbm [resolvable:$true] %s447
          %450 = dma.vmem_to_hbm [thread:$0]  %s446, 32, %s448, [#allocation4]
        $region44: #{tpu_custom_call.1} parent=27 // pred_fallthru
          _
        // Predicated region
        $region45: #{tpu_custom_call.1} parent=27 // pred_check
          %p451 = pneg %p102
        $region46: #{tpu_custom_call.1} parent=27 // pred_check_branch
          %453 = sbr.rel (%p451) target = $region48
        $region47: #{tpu_custom_call.1} parent=27 // pred_region
          %455 = vsyncadd [#allocation9], 0
          %s457 = sshll.u32 [#allocation8], 4
          %s458 = int_to_ptr.vmem [resolvable:$true] %s457
          %s459 = sshll.u32 %s3, 4
          %s460 = int_to_ptr.hbm [resolvable:$true] %s459
          %462 = dma.vmem_to_hbm [thread:$0]  %s458, 32, %s460, [#allocation9]
        $region48: #{tpu_custom_call.1} parent=27 // pred_fallthru
          _
        // Predicated region
        $region49: #{tpu_custom_call.1} parent=27 // pred_check
          %p463 = pneg %p81
        $region50: #{tpu_custom_call.1} parent=27 // pred_check_branch
          %465 = sbr.rel (%p463) target = $region52
        $region51: #{tpu_custom_call.1} parent=27 // pred_region
          %467 = dma.done [#allocation4], 32
        $region52: #{tpu_custom_call.1} parent=27 // pred_fallthru
          _
        // Predicated region
        $region53: #{tpu_custom_call.1} parent=27 // pred_check
          %p468 = pneg %p102
        $region54: #{tpu_custom_call.1} parent=27 // pred_check_branch
          %470 = sbr.rel (%p468) target = $region56
        $region55: #{tpu_custom_call.1} parent=27 // pred_region
          %472 = dma.done [#allocation9], 32
        $region56: #{tpu_custom_call.1} parent=27 // pred_fallthru
          _
      $region28: #{tpu_custom_call.1} parent=5 // pred_fallthru
        _
      %p473 = scmp.le.s32.totalorder 2, %s16
      // Predicated region
      $region57: #{tpu_custom_call.1} parent=5 // pred_check
        %p474 = pneg %p473
      $region58: #{tpu_custom_call.1} parent=5 // pred_check_branch
        %476 = sbr.rel (%p474) target = $region60
      $region59: #{tpu_custom_call.1} parent=5 // pred_region
        %s477 = ssub.s32 %s16, 2
      $region60: #{tpu_custom_call.1} parent=5 // pred_fallthru
        _
    $region6: #{tpu_custom_call.1} parent=1 // loop_footer
      %s20 = sadd.s32 1, %s16
    $region7: #{tpu_custom_call.1} parent=1 // loop_footer_branch
      %15 = sbr.rel target = $region3
    $region8: #{tpu_custom_call.1} parent=1 // loop_exit
      _
    %478 = vsyncpa [#allocation3], 1
    %s479 = scalar_lea.sflag [#allocation3], 1
    %480 = vsyncpa %s479, 1
    %481 = vsyncpa [#allocation6], 1
    %482 = vsyncpa [#allocation4], 1
    %s483 = scalar_lea.sflag [#allocation4], 1
    %484 = vsyncpa %s483, 1
    %485 = vsyncpa [#allocation9], 1

</llo_original>
